<compile_context>
chip_gen: v7x
topology: tpu7x:2x2x1
jax: 0.10.0
libtpu: 0.0.40
codegen_flags: <defaults>
</compile_context>

<pallas_src>
import functools

import jax
import jax.numpy as jnp
from jax.experimental import pallas as pl
from jax.experimental.pallas import tpu as pltpu


_LANE = 128
_VMEM_LIMIT = 48 * 1024 * 1024     # raised scoped-VMEM budget (stays under v7x 64 MiB physical)
_FUSE_MAX_N = 2048                 # n_pad up to which A_hat (bf16) is kept fully VMEM-resident


# ----------------------------- helpers ---------------------------------------


def _round_up(x, m):
    return ((x + m - 1) // m) * m


def _largest_tile(n_pad, cap):
    """Largest multiple-of-128 divisor of n_pad that is <= cap (n_pad % 128 == 0)."""
    m = n_pad // _LANE
    best = 1
    for d in range(1, m + 1):
        if m % d == 0 and d * _LANE <= cap:
            best = d
    return best * _LANE


def _choose_tiles(n_pad):
    cap_tm = 512
    if n_pad >= 256:
        # keep >= 2 row tiles so the "parallel" row axis can shard across v7x's 2 TCs
        cap_tm = min(cap_tm, n_pad // 2)
    tm = _largest_tile(n_pad, cap_tm)
    tk = _largest_tile(n_pad, 2048)
    return tm, tk


# ----------------------------- kernels ----------------------------------------


def _gcn_layer_kernel(a_ref, hw_ref, b_ref, o_ref, acc_ref, *, tk):
    """One GCN layer: relu(A_hat @ HW + b).  Grid = (row tiles, K tiles).

    HW = H @ W is precomputed (wrapper) and fully VMEM-resident; the hot loop is a
    single streaming MXU op per step.
    """
    k = pl.program_id(1)

    @pl.when(k == 0)
    def _init():
        acc_ref[...] = jnp.zeros_like(acc_ref)

    start = pl.multiple_of(k * tk, tk)
    acc_ref[...] += jnp.dot(a_ref[...], hw_ref[pl.ds(start, tk), :],
                            preferred_element_type=jnp.float32)

    @pl.when(k == pl.num_programs(1) - 1)
    def _finalize():
        o_ref[...] = jnp.maximum(acc_ref[...] + b_ref[...], 0.0).astype(o_ref.dtype)


def _pool_fc_kernel(p_ref, h_ref, wfc_ref, bfc_ref, out_ref):
    """global_mean_pool (P @ H) fused with the final Linear(H, 1).

    Linear(H,1) as a 1-wide MXU output would waste columns + masked stores; use a VPU
    multiply + lane reduction and write a lane-dense [G_pad, Hp] slab (col 0 is the
    answer, sliced by the wrapper).
    """
    pooled = jnp.dot(p_ref[...], h_ref[...], preferred_element_type=jnp.float32)
    y = jnp.sum(pooled * wfc_ref[...], axis=-1, keepdims=True)
    out_ref[...] = jnp.broadcast_to(y + bfc_ref[0, 0], out_ref.shape)


def _fused_kernel(a_ref, hw1_ref, w2_ref, w3_ref, b1_ref, b2_ref, b3_ref,
                  p_ref, wfc_ref, bfc_ref, out_ref):
    """All three GCN layers + mean-pool + Linear with A_hat resident in VMEM (read once)."""
    a = a_ref[...]                                                        # bf16, resident
    h = jnp.maximum(jnp.dot(a, hw1_ref[...], preferred_element_type=jnp.float32)
                    + b1_ref[...], 0.0).astype(jnp.bfloat16)
    hw = jnp.dot(h, w2_ref[...], preferred_element_type=jnp.float32).astype(jnp.bfloat16)
    h = jnp.maximum(jnp.dot(a, hw, preferred_element_type=jnp.float32)
                    + b2_ref[...], 0.0).astype(jnp.bfloat16)
    hw = jnp.dot(h, w3_ref[...], preferred_element_type=jnp.float32).astype(jnp.bfloat16)
    h = jnp.maximum(jnp.dot(a, hw, preferred_element_type=jnp.float32)
                    + b3_ref[...], 0.0).astype(jnp.bfloat16)
    pooled = jnp.dot(p_ref[...], h, preferred_element_type=jnp.float32)
    y = jnp.sum(pooled * wfc_ref[...], axis=-1, keepdims=True)
    out_ref[...] = jnp.broadcast_to(y + bfc_ref[0, 0], out_ref.shape)


# ----------------------------- pallas wrappers --------------------------------


def _gcn_layer(a_pad, hw, b, *, tm, tk):
    n_pad = a_pad.shape[0]
    hp = hw.shape[1]
    vmem = pl.BlockSpec(memory_space=pltpu.MemorySpace.VMEM)
    return pl.pallas_call(
        functools.partial(_gcn_layer_kernel, tk=tk),
        out_shape=jax.ShapeDtypeStruct((n_pad, hp), jnp.bfloat16),
        grid_spec=pltpu.PrefetchScalarGridSpec(
            num_scalar_prefetch=0,
            grid=(n_pad // tm, n_pad // tk),
            in_specs=[
                pl.BlockSpec((tm, tk), lambda i, k: (i, k)),   # A_hat tile (bf16, streamed)
                vmem,                                          # HW (fully resident)
                vmem,                                          # bias [1, Hp] f32 (resident)
            ],
            out_specs=pl.BlockSpec((tm, hp), lambda i, k: (i, 0)),
            scratch_shapes=[pltpu.VMEM((tm, hp), jnp.float32)],
        ),
        compiler_params=pltpu.CompilerParams(
            dimension_semantics=("parallel", "arbitrary"),
            vmem_limit_bytes=_VMEM_LIMIT),
    )(a_pad, hw, b)


def _pool_fc(p_pad, h, wfc_row, bfc):
    g_pad = p_pad.shape[0]
    hp = h.shape[1]
    vmem = pl.BlockSpec(memory_space=pltpu.MemorySpace.VMEM)
    return pl.pallas_call(
        _pool_fc_kernel,
        out_shape=jax.ShapeDtypeStruct((g_pad, hp), jnp.float32),
        in_specs=[vmem, vmem, vmem,
                  pl.BlockSpec(memory_space=pltpu.MemorySpace.SMEM)],
        out_specs=vmem,
        compiler_params=pltpu.CompilerParams(vmem_limit_bytes=_VMEM_LIMIT),
    )(p_pad, h, wfc_row, bfc)


def _fused_forward(a_pad, hw1, w2, w3, b1, b2, b3, p_pad, wfc_row, bfc):
    g_pad = p_pad.shape[0]
    hp = hw1.shape[1]
    vmem = pl.BlockSpec(memory_space=pltpu.MemorySpace.VMEM)
    return pl.pallas_call(
        _fused_kernel,
        out_shape=jax.ShapeDtypeStruct((g_pad, hp), jnp.float32),
        in_specs=[vmem] * 9 + [pl.BlockSpec(memory_space=pltpu.MemorySpace.SMEM)],
        out_specs=vmem,
        compiler_params=pltpu.CompilerParams(vmem_limit_bytes=_VMEM_LIMIT),
    )(a_pad, hw1, w2, w3, b1, b2, b3, p_pad, wfc_row, bfc)


def gcn_forward_pallas(a_hat, x, params, pool_mat, *, force_tiled=False):
    (w1, b1, w2, b2, w3, b3, wfc, bfc) = params
    n = a_hat.shape[0]
    g = pool_mat.shape[0]
    h_dim = w1.shape[1]

    hp = _round_up(h_dim, _LANE)        # lane-pad hidden dim
    n_pad = _round_up(n, _LANE)         # pad nodes to 128 only (A traffic ~ n_pad^2)
    g_pad = _round_up(g, 8)

    # Zero padding is inert: padded A rows/cols, weight lanes, pool rows/cols are 0,
    # so real outputs are unchanged and sliced out at the end.  A / P are built
    # directly in bf16 (single pad pass over the N^2 operand).
    a_pad = jnp.pad(a_hat.astype(jnp.bfloat16),
                    ((0, n_pad - n), (0, n_pad - n)))
    x_pad = jnp.pad(x.astype(jnp.float32), ((0, n_pad - n), (0, 0)))
    p_pad = jnp.pad(pool_mat.astype(jnp.bfloat16),
                    ((0, g_pad - g), (0, n_pad - n)))

    def pad2(m, r, c):
        return jnp.pad(m, ((0, r - m.shape[0]), (0, c - m.shape[1])))

    w1p, b1p = pad2(w1, 1, hp), pad2(b1, 1, hp)                            # f32
    w2p, b2p = pad2(w2, hp, hp).astype(jnp.bfloat16), pad2(b2, 1, hp)      # bf16 W, f32 b
    w3p, b3p = pad2(w3, hp, hp).astype(jnp.bfloat16), pad2(b3, 1, hp)
    wfc_row = pad2(wfc.T, 1, hp)                                           # [1, Hp] f32
    bfc2 = bfc.reshape(1, 1).astype(jnp.float32)

    # Layer-1 GCNConv(1, H): the [N,1]@[1,H] "matmul" (K=1, degenerate MXU shape) is a
    # broadcast outer product; do it once in the wrapper.
    hw1 = (x_pad * w1p).astype(jnp.bfloat16)                               # [n_pad, Hp]

    if n_pad <= _FUSE_MAX_N and not force_tiled:
        # A_hat fits in VMEM: read it from HBM once, fuse all layers + pool + fc.
        out = _fused_forward(a_pad, hw1, w2p, w3p, b1p, b2p, b3p,
                             p_pad, wfc_row, bfc2)
    else:
        # Large graphs: stream A tiles per layer; HW precomputed per layer (trivial dot)
        # and fully VMEM-resident inside the layer kernel.
        tm, tk = _choose_tiles(n_pad)
        h = _gcn_layer(a_pad, hw1, b1p, tm=tm, tk=tk)
        hw2 = jnp.dot(h, w2p, preferred_element_type=jnp.float32).astype(jnp.bfloat16)
        h = _gcn_layer(a_pad, hw2, b2p, tm=tm, tk=tk)
        hw3 = jnp.dot(h, w3p, preferred_element_type=jnp.float32).astype(jnp.bfloat16)
        h = _gcn_layer(a_pad, hw3, b3p, tm=tm, tk=tk)
        out = _pool_fc(p_pad, h, wfc_row, bfc2)

    return out[:g, :1]


# ----------------------------- pure-JAX reference ------------------------------
# Mirrors the kernel numerics (bf16 MXU inputs, f32 accumulation) so the check is tight.


def gcn_forward_ref(a_hat, x, params, pool_mat):
    (w1, b1, w2, b2, w3, b3, wfc, bfc) = params
    a = a_hat.astype(jnp.bfloat16)

    hw = x * w1                                                       # [N,1]*[1,H]
    h = jnp.maximum(jnp.dot(a, hw.astype(jnp.bfloat16),
                            preferred_element_type=jnp.float32) + b1, 0.0)
    h = h.astype(jnp.bfloat16)
    for w, b in ((w2, b2), (w3, b3)):
        hw = jnp.dot(h, w.astype(jnp.bfloat16),
                     preferred_element_type=jnp.float32)
        h = jnp.maximum(jnp.dot(a, hw.astype(jnp.bfloat16),
                                preferred_element_type=jnp.float32) + b, 0.0)
        h = h.astype(jnp.bfloat16)

    pooled = jnp.dot(pool_mat.astype(jnp.bfloat16), h,
                     preferred_element_type=jnp.float32)
    return jnp.sum(pooled * wfc.T, axis=-1, keepdims=True) + bfc


# ----------------------------- graph -> dense glue -----------------------------


def build_normalized_adjacency(edge_index, num_nodes):
    # Dense A from the edge list (messages src -> dst), add self loops, then
    # symmetric normalization D^-1/2 (A + I) D^-1/2 (PyG gcn_norm semantics).
    # TODO(synk): duplicate edges are deduplicated here; PyG's scatter-add would sum them.
    src, dst = edge_index[0], edge_index[1]
    a = jnp.zeros((num_nodes, num_nodes), jnp.float32).at[dst, src].set(1.0)
    a = a + jnp.eye(num_nodes, dtype=jnp.float32)
    deg = a.sum(axis=1)
    d_inv_sqrt = jnp.where(deg > 0, 1.0 / jnp.sqrt(deg), 0.0)
    return d_inv_sqrt[:, None] * a * d_inv_sqrt[None, :]


def build_pool_matrix(batch, num_graphs):
    onehot = (batch[None, :] == jnp.arange(num_graphs)[:, None]).astype(jnp.float32)
    counts = jnp.maximum(onehot.sum(axis=1, keepdims=True), 1.0)
    return onehot / counts


def init_params(key, hidden_dim):
    ks = jax.random.split(key, 8)
    scale = 0.2
    w1 = scale * jax.random.normal(ks[0], (1, hidden_dim), jnp.float32)
    b1 = scale * jax.random.normal(ks[1], (1, hidden_dim), jnp.float32)
    w2 = scale * jax.random.normal(ks[2], (hidden_dim, hidden_dim), jnp.float32)
    b2 = scale * jax.random.normal(ks[3], (1, hidden_dim), jnp.float32)
    w3 = scale * jax.random.normal(ks[4], (hidden_dim, hidden_dim), jnp.float32)
    b3 = scale * jax.random.normal(ks[5], (1, hidden_dim), jnp.float32)
    wfc = scale * jax.random.normal(ks[6], (hidden_dim, 1), jnp.float32)
    bfc = scale * jax.random.normal(ks[7], (1, 1), jnp.float32)
    return (w1, b1, w2, b2, w3, b3, wfc, bfc)


if __name__ == "__main__":
    key = jax.random.PRNGKey(0)
    k_x, k_p = jax.random.split(key)

    hidden_dim = 32
    num_nodes = 16          # two graphs of 8 nodes each
    num_graphs = 2          # NOTE: amortize launch cost by batching many graphs per call

    # Node features: [N, 1] (GCNConv(1, hidden_dim) input channel = 1).
    x = jax.random.normal(k_x, (num_nodes, 1), jnp.float32)

    # Edge index [2, E]: chain within each graph, both directions (symmetric).
    src_list, dst_list = [], []
    for gi in range(num_graphs):
        base = gi * 8
        for i in range(7):
            src_list += [base + i, base + i + 1]
            dst_list += [base + i + 1, base + i]
    edge_index = jnp.array([src_list, dst_list], dtype=jnp.int32)

    # Graph assignment vector.
    batch = jnp.repeat(jnp.arange(num_graphs, dtype=jnp.int32), 8)

    a_hat = build_normalized_adjacency(edge_index, num_nodes)
    pool_mat = build_pool_matrix(batch, num_graphs)
    params = init_params(k_p, hidden_dim)

    # Fused (A-resident) path — the one used at these shapes.
    out_fused = jax.block_until_ready(gcn_forward_pallas(a_hat, x, params, pool_mat))
    # Tiled streaming path — exercised explicitly so both code paths are verified.
    out_tiled = jax.block_until_ready(
        gcn_forward_pallas(a_hat, x, params, pool_mat, force_tiled=True))

    ref = gcn_forward_ref(a_hat, x, params, pool_mat)
    assert out_fused.shape == (num_graphs, 1)
    assert out_tiled.shape == (num_graphs, 1)
    assert jnp.allclose(out_fused, ref, rtol=1e-3, atol=1e-3), (out_fused, ref)
    assert jnp.allclose(out_tiled, ref, rtol=1e-3, atol=1e-3), (out_tiled, ref)

    print("KERNEL_OK")
</pallas_src>

<mosaic_0001>
module attributes {stable_mosaic.version = 11 : i64} {
  func.func @_fused_kernel(%arg0: memref<128x128xbf16, #tpu.memory_space<vmem>>, %arg1: memref<128x128xbf16, #tpu.memory_space<vmem>>, %arg2: memref<128x128xbf16, #tpu.memory_space<vmem>>, %arg3: memref<128x128xbf16, #tpu.memory_space<vmem>>, %arg4: memref<1x128xf32, #tpu.memory_space<vmem>>, %arg5: memref<1x128xf32, #tpu.memory_space<vmem>>, %arg6: memref<1x128xf32, #tpu.memory_space<vmem>>, %arg7: memref<8x128xbf16, #tpu.memory_space<vmem>>, %arg8: memref<1x128xf32, #tpu.memory_space<vmem>>, %arg9: memref<1x1xf32, #tpu.memory_space<smem>>, %arg10: memref<8x128xf32, #tpu.memory_space<vmem>>) attributes {dimension_semantics = [], scalar_prefetch = 0 : i64, scratch_operands = 0 : i64, tpu.core_type = #tpu.core_type<tc>} {
    %c0 = arith.constant 0 : index
    %c0_0 = arith.constant 0 : index
    %0 = vector.load %arg0[%c0, %c0_0] : memref<128x128xbf16, #tpu.memory_space<vmem>>, vector<128x128xbf16>
    %c0_1 = arith.constant 0 : index
    %c0_2 = arith.constant 0 : index
    %1 = vector.load %arg1[%c0_1, %c0_2] : memref<128x128xbf16, #tpu.memory_space<vmem>>, vector<128x128xbf16>
    %cst = arith.constant dense<0.000000e+00> : vector<128x128xf32>
    %2 = tpu.matmul %0, %1, %cst {dimension_numbers = #tpu.dot_dimension_numbers<[1], [0], [0], [1], [0, 0, 1, 1], [], []>} : vector<128x128xbf16>, vector<128x128xbf16>, vector<128x128xf32> -> vector<128x128xf32>
    %c0_3 = arith.constant 0 : index
    %c0_4 = arith.constant 0 : index
    %3 = vector.load %arg4[%c0_3, %c0_4] : memref<1x128xf32, #tpu.memory_space<vmem>>, vector<1x128xf32>
    %4 = vector.broadcast %3 : vector<1x128xf32> to vector<128x128xf32>
    %5 = arith.addf %2, %4 : vector<128x128xf32>
    %cst_5 = arith.constant 0.000000e+00 : f32
    %6 = vector.broadcast %cst_5 : f32 to vector<128x128xf32>
    %7 = arith.maximumf %5, %6 : vector<128x128xf32>
    %8 = arith.truncf %7 : vector<128x128xf32> to vector<128x128xbf16>
    %c0_6 = arith.constant 0 : index
    %c0_7 = arith.constant 0 : index
    %9 = vector.load %arg2[%c0_6, %c0_7] : memref<128x128xbf16, #tpu.memory_space<vmem>>, vector<128x128xbf16>
    %cst_8 = arith.constant dense<0.000000e+00> : vector<128x128xf32>
    %10 = tpu.matmul %8, %9, %cst_8 {dimension_numbers = #tpu.dot_dimension_numbers<[1], [0], [0], [1], [0, 0, 1, 1], [], []>} : vector<128x128xbf16>, vector<128x128xbf16>, vector<128x128xf32> -> vector<128x128xf32>
    %11 = arith.truncf %10 : vector<128x128xf32> to vector<128x128xbf16>
    %cst_9 = arith.constant dense<0.000000e+00> : vector<128x128xf32>
    %12 = tpu.matmul %0, %11, %cst_9 {dimension_numbers = #tpu.dot_dimension_numbers<[1], [0], [0], [1], [0, 0, 1, 1], [], []>} : vector<128x128xbf16>, vector<128x128xbf16>, vector<128x128xf32> -> vector<128x128xf32>
    %c0_10 = arith.constant 0 : index
    %c0_11 = arith.constant 0 : index
    %13 = vector.load %arg5[%c0_10, %c0_11] : memref<1x128xf32, #tpu.memory_space<vmem>>, vector<1x128xf32>
    %14 = vector.broadcast %13 : vector<1x128xf32> to vector<128x128xf32>
    %15 = arith.addf %12, %14 : vector<128x128xf32>
    %cst_12 = arith.constant 0.000000e+00 : f32
    %16 = vector.broadcast %cst_12 : f32 to vector<128x128xf32>
    %17 = arith.maximumf %15, %16 : vector<128x128xf32>
    %18 = arith.truncf %17 : vector<128x128xf32> to vector<128x128xbf16>
    %c0_13 = arith.constant 0 : index
    %c0_14 = arith.constant 0 : index
    %19 = vector.load %arg3[%c0_13, %c0_14] : memref<128x128xbf16, #tpu.memory_space<vmem>>, vector<128x128xbf16>
    %cst_15 = arith.constant dense<0.000000e+00> : vector<128x128xf32>
    %20 = tpu.matmul %18, %19, %cst_15 {dimension_numbers = #tpu.dot_dimension_numbers<[1], [0], [0], [1], [0, 0, 1, 1], [], []>} : vector<128x128xbf16>, vector<128x128xbf16>, vector<128x128xf32> -> vector<128x128xf32>
    %21 = arith.truncf %20 : vector<128x128xf32> to vector<128x128xbf16>
    %cst_16 = arith.constant dense<0.000000e+00> : vector<128x128xf32>
    %22 = tpu.matmul %0, %21, %cst_16 {dimension_numbers = #tpu.dot_dimension_numbers<[1], [0], [0], [1], [0, 0, 1, 1], [], []>} : vector<128x128xbf16>, vector<128x128xbf16>, vector<128x128xf32> -> vector<128x128xf32>
    %c0_17 = arith.constant 0 : index
    %c0_18 = arith.constant 0 : index
    %23 = vector.load %arg6[%c0_17, %c0_18] : memref<1x128xf32, #tpu.memory_space<vmem>>, vector<1x128xf32>
    %24 = vector.broadcast %23 : vector<1x128xf32> to vector<128x128xf32>
    %25 = arith.addf %22, %24 : vector<128x128xf32>
    %cst_19 = arith.constant 0.000000e+00 : f32
    %26 = vector.broadcast %cst_19 : f32 to vector<128x128xf32>
    %27 = arith.maximumf %25, %26 : vector<128x128xf32>
    %28 = arith.truncf %27 : vector<128x128xf32> to vector<128x128xbf16>
    %c0_20 = arith.constant 0 : index
    %c0_21 = arith.constant 0 : index
    %29 = vector.load %arg7[%c0_20, %c0_21] : memref<8x128xbf16, #tpu.memory_space<vmem>>, vector<8x128xbf16>
    %cst_22 = arith.constant dense<0.000000e+00> : vector<8x128xf32>
    %30 = tpu.matmul %29, %28, %cst_22 {dimension_numbers = #tpu.dot_dimension_numbers<[1], [0], [0], [1], [0, 0, 1, 1], [], []>} : vector<8x128xbf16>, vector<128x128xbf16>, vector<8x128xf32> -> vector<8x128xf32>
    %c0_23 = arith.constant 0 : index
    %c0_24 = arith.constant 0 : index
    %31 = vector.load %arg8[%c0_23, %c0_24] : memref<1x128xf32, #tpu.memory_space<vmem>>, vector<1x128xf32>
    %32 = vector.broadcast %31 : vector<1x128xf32> to vector<8x128xf32>
    %33 = arith.mulf %30, %32 : vector<8x128xf32>
    %cst_25 = arith.constant dense<0.000000e+00> : vector<8xf32>
    %34 = vector.multi_reduction <add>, %33, %cst_25 [1] : vector<8x128xf32> to vector<8xf32>
    %35 = vector.shape_cast %34 : vector<8xf32> to vector<8x1xf32>
    %c0_26 = arith.constant 0 : index
    %c0_27 = arith.constant 0 : index
    %36 = memref.load %arg9[%c0_26, %c0_27] : memref<1x1xf32, #tpu.memory_space<smem>>
    %37 = vector.broadcast %36 : f32 to vector<8x1xf32>
    %38 = arith.addf %35, %37 : vector<8x1xf32>
    %39 = vector.shape_cast %38 : vector<8x1xf32> to vector<8x1xf32>
    %40 = vector.broadcast %39 : vector<8x1xf32> to vector<8x128xf32>
    %c0_28 = arith.constant 0 : index
    %c0_29 = arith.constant 0 : index
    %41 = vector.load %arg10[%c0_28, %c0_29] : memref<8x128xf32, #tpu.memory_space<vmem>>, vector<8x128xf32>
    tpu.vector_store %arg10[%c0_28, %c0_29], %40 {strides = array<i32>} : memref<8x128xf32, #tpu.memory_space<vmem>>, vector<8x128xf32>,
    return
  }
}

</mosaic_0001>

<llo_original>
// kernel: tpu_custom_call.1
$region0: #{tpu_custom_call.1}
  #allocation0 [shape = 'u32[]', space=smem, size = 0x4, offset = 0x4, fixed_abs, tag = 'smem constant byte address 0x4 - core index']
  #allocation1 [shape = 'u32[144,128]{1,0:T(1,128)}', space=vmem, size = 0x12000, scoped, tag = 'internal scratch']
  #allocation2 [shape = 'f32[1,1]{1,0:T(1,128)S(6)}', space=smem, size = 0x200, scoped, tag = 'scoped memory for tpu_custom_call.1']
  %s0 = inlined_call_operand.hbm [shape: bf16[128,128], index: 0, kind: input, shape index: {}]
  %s1 = inlined_call_operand.hbm [shape: bf16[128,128], index: 1, kind: input, shape index: {}]
  %s2 = inlined_call_operand.hbm [shape: bf16[128,128], index: 2, kind: input, shape index: {}]
  %s3 = inlined_call_operand.hbm [shape: bf16[128,128], index: 3, kind: input, shape index: {}]
  %s4 = inlined_call_operand.vmem [shape: f32[1,128], index: 4, kind: input, shape index: {}]
  %s5 = inlined_call_operand.vmem [shape: f32[1,128], index: 5, kind: input, shape index: {}]
  %s6 = inlined_call_operand.vmem [shape: f32[1,128], index: 6, kind: input, shape index: {}]
  %s7 = inlined_call_operand.vmem [shape: bf16[8,128], index: 7, kind: input, shape index: {}]
  %s8 = inlined_call_operand.vmem [shape: f32[1,128], index: 8, kind: input, shape index: {}]
  %s9 = inlined_call_operand.<no memory space> [shape: f32[1,1], index: 9, kind: input, shape index: {}]
  %s10 = inlined_call_operand.hbm [shape: f32[8,128], index: 10, kind: output, shape index: {}]
  %s11 = sld [smem:[#allocation0]]
  $region66: #{tpu_custom_call.1} parent=0
    _
  %s13 = ssub.s32 1, %s11
  %s14 = scalar_select 0, %s13, %s11
  %15 = sst [smem:[#allocation2]] %s9
  $region1: #{tpu_custom_call.1} parent=0
    #allocation3 [shape = 'u8[32768]{0}', space=vmem, size = 0x8000, scoped, tag = 'input window, operand 0, single buffered']
    #allocation4 [shape = 's32[1]{0}', space=sflag, size = 0x4, scoped, tag = 'scoped memory for tpu_custom_call.1']
    #allocation5 [shape = 's32[1]{0}', space=sflag, size = 0x4, scoped, tag = 'scoped memory for tpu_custom_call.1']
    #allocation6 [shape = 'u8[32768]{0}', space=vmem, size = 0x8000, scoped, tag = 'input window, operand 1, single buffered']
    #allocation7 [shape = 's32[1]{0}', space=sflag, size = 0x4, scoped, tag = 'scoped memory for tpu_custom_call.1']
    #allocation8 [shape = 'u8[32768]{0}', space=vmem, size = 0x8000, scoped, tag = 'input window, operand 2, single buffered']
    #allocation9 [shape = 'u8[32768]{0}', space=vmem, size = 0x8000, scoped, tag = 'input window, operand 3, single buffered']
    #allocation10 [shape = 's32[1]{0}', space=sflag, size = 0x4, scoped, tag = 'scoped memory for tpu_custom_call.1']
    #allocation11 [shape = 'u8[4096]{0}', space=vmem, size = 0x1000, scoped, tag = 'output window, operand 0, single buffered']
    %16 = vsyncpa [#allocation4], 0
    %17 = vsyncpa [#allocation7], 0
    %18 = vsyncpa [#allocation10], 0
    %19 = vsyncpa [#allocation5], 0
    // Predicated region
    $region2: #{tpu_custom_call.1} parent=1 // pred_check
      _
    $region3: #{tpu_custom_call.1} parent=1 // pred_check_branch
      %21 = sbr.rel (0) target = $region5
    $region4: #{tpu_custom_call.1} parent=1 // pred_region
      %s23 = ssub.s32 1024, 1024
      %24 = vsyncadd [#allocation4], %s23
      %s25 = sshll.u32 [#allocation3], 4
      %s26 = int_to_ptr.vmem [resolvable:$true] %s25
      %31 = dma.hbm_to_vmem [thread:$0]  %s0, 1024, %s26, [#allocation4], 64, 64, 4
    $region5: #{tpu_custom_call.1} parent=1 // pred_fallthru
      _
    // Predicated region
    $region6: #{tpu_custom_call.1} parent=1 // pred_check
      _
    $region7: #{tpu_custom_call.1} parent=1 // pred_check_branch
      %33 = sbr.rel (0) target = $region9
    $region8: #{tpu_custom_call.1} parent=1 // pred_region
      %s35 = ssub.s32 1024, 1024
      %36 = vsyncadd [#allocation7], %s35
      %s37 = sshll.u32 [#allocation6], 4
      %s38 = int_to_ptr.vmem [resolvable:$true] %s37
      %43 = dma.hbm_to_vmem [thread:$0]  %s1, 1024, %s38, [#allocation7], 64, 64, 4
    $region9: #{tpu_custom_call.1} parent=1 // pred_fallthru
      _
    // Predicated region
    $region10: #{tpu_custom_call.1} parent=1 // pred_check
      _
    $region11: #{tpu_custom_call.1} parent=1 // pred_check_branch
      %45 = sbr.rel (0) target = $region13
    $region12: #{tpu_custom_call.1} parent=1 // pred_region
      %s47 = ssub.s32 1024, 1024
      %48 = vsyncadd [#allocation7], %s47
      %s49 = sshll.u32 [#allocation8], 4
      %s50 = int_to_ptr.vmem [resolvable:$true] %s49
      %55 = dma.hbm_to_vmem [thread:$0]  %s2, 1024, %s50, [#allocation7], 64, 64, 4
    $region13: #{tpu_custom_call.1} parent=1 // pred_fallthru
      _
    // Predicated region
    $region14: #{tpu_custom_call.1} parent=1 // pred_check
      _
    $region15: #{tpu_custom_call.1} parent=1 // pred_check_branch
      %57 = sbr.rel (0) target = $region17
    $region16: #{tpu_custom_call.1} parent=1 // pred_region
      %s59 = ssub.s32 1024, 1024
      %60 = vsyncadd [#allocation10], %s59
      %s61 = sshll.u32 [#allocation9], 4
      %s62 = int_to_ptr.vmem [resolvable:$true] %s61
      %67 = dma.hbm_to_vmem [thread:$0]  %s3, 1024, %s62, [#allocation10], 64, 64, 4
    $region17: #{tpu_custom_call.1} parent=1 // pred_fallthru
      _
    // Predicated region
    $region18: #{tpu_custom_call.1} parent=1 // pred_check
      _
    $region19: #{tpu_custom_call.1} parent=1 // pred_check_branch
      %69 = sbr.rel (0) target = $region21
    $region20: #{tpu_custom_call.1} parent=1 // pred_region
      _
    $region21: #{tpu_custom_call.1} parent=1 // pred_fallthru
      _
    // Predicated region
    $region22: #{tpu_custom_call.1} parent=1 // pred_check
      _
    $region23: #{tpu_custom_call.1} parent=1 // pred_check_branch
      %71 = sbr.rel (0) target = $region25
    $region24: #{tpu_custom_call.1} parent=1 // pred_region
      _
    $region25: #{tpu_custom_call.1} parent=1 // pred_fallthru
      _
    // Predicated region
    $region26: #{tpu_custom_call.1} parent=1 // pred_check
      _
    $region27: #{tpu_custom_call.1} parent=1 // pred_check_branch
      %73 = sbr.rel (0) target = $region29
    $region28: #{tpu_custom_call.1} parent=1 // pred_region
      _
    $region29: #{tpu_custom_call.1} parent=1 // pred_fallthru
      _
    // Predicated region
    $region30: #{tpu_custom_call.1} parent=1 // pred_check
      _
    $region31: #{tpu_custom_call.1} parent=1 // pred_check_branch
      %75 = sbr.rel (0) target = $region33
    $region32: #{tpu_custom_call.1} parent=1 // pred_region
      _
    $region33: #{tpu_custom_call.1} parent=1 // pred_fallthru
      _
    // Predicated region
    $region34: #{tpu_custom_call.1} parent=1 // pred_check
      _
    $region35: #{tpu_custom_call.1} parent=1 // pred_check_branch
      %77 = sbr.rel (0) target = $region37
    $region36: #{tpu_custom_call.1} parent=1 // pred_region
      _
    $region37: #{tpu_custom_call.1} parent=1 // pred_fallthru
      _
    // Predicated region
    $region38: #{tpu_custom_call.1} parent=1 // pred_check
      _
    $region39: #{tpu_custom_call.1} parent=1 // pred_check_branch
      %79 = sbr.rel (0) target = $region41
    $region40: #{tpu_custom_call.1} parent=1 // pred_region
      _
    $region41: #{tpu_custom_call.1} parent=1 // pred_fallthru
      _
    // Predicated region
    $region42: #{tpu_custom_call.1} parent=1 // pred_check
      _
    $region43: #{tpu_custom_call.1} parent=1 // pred_check_branch
      %81 = sbr.rel (0) target = $region45
    $region44: #{tpu_custom_call.1} parent=1 // pred_region
      %82 = dma.done [#allocation4], 1024
    $region45: #{tpu_custom_call.1} parent=1 // pred_fallthru
      _
    // Predicated region
    $region46: #{tpu_custom_call.1} parent=1 // pred_check
      _
    $region47: #{tpu_custom_call.1} parent=1 // pred_check_branch
      %84 = sbr.rel (0) target = $region49
    $region48: #{tpu_custom_call.1} parent=1 // pred_region
      %85 = dma.done [#allocation7], 1024
    $region49: #{tpu_custom_call.1} parent=1 // pred_fallthru
      _
    // Predicated region
    $region50: #{tpu_custom_call.1} parent=1 // pred_check
      _
    $region51: #{tpu_custom_call.1} parent=1 // pred_check_branch
      %87 = sbr.rel (0) target = $region53
    $region52: #{tpu_custom_call.1} parent=1 // pred_region
      %88 = dma.done [#allocation7], 1024
    $region53: #{tpu_custom_call.1} parent=1 // pred_fallthru
      _
    // Predicated region
    $region54: #{tpu_custom_call.1} parent=1 // pred_check
      _
    $region55: #{tpu_custom_call.1} parent=1 // pred_check_branch
      %90 = sbr.rel (0) target = $region57
    $region56: #{tpu_custom_call.1} parent=1 // pred_region
      %91 = dma.done [#allocation10], 1024
    $region57: #{tpu_custom_call.1} parent=1 // pred_fallthru
      _
    %v93 = vld [vmem:[#allocation3] sm:$0xf]
    %v94 = vld [vmem:[#allocation3 + $0x4] sm:$0xf]
    %v95 = vld [vmem:[#allocation3 + $0x8] sm:$0xf]
    %v96 = vld [vmem:[#allocation3 + $0xc] sm:$0xf]
    %v97 = vld [vmem:[#allocation3 + $0x10] sm:$0xf]
    %v98 = vld [vmem:[#allocation3 + $0x14] sm:$0xf]
    %v99 = vld [vmem:[#allocation3 + $0x18] sm:$0xf]
    %v100 = vld [vmem:[#allocation3 + $0x1c] sm:$0xf]
    %v101 = vld [vmem:[#allocation3 + $0x20] sm:$0xf]
    %v102 = vld [vmem:[#allocation3 + $0x24] sm:$0xf]
    %v103 = vld [vmem:[#allocation3 + $0x28] sm:$0xf]
    %v104 = vld [vmem:[#allocation3 + $0x2c] sm:$0xf]
    %v105 = vld [vmem:[#allocation3 + $0x30] sm:$0xf]
    %v106 = vld [vmem:[#allocation3 + $0x34] sm:$0xf]
    %v107 = vld [vmem:[#allocation3 + $0x38] sm:$0xf]
    %v108 = vld [vmem:[#allocation3 + $0x3c] sm:$0xf]
    %v109 = vld [vmem:[#allocation6] sm:$0xf]
    %v110 = vld [vmem:[#allocation6 + $0x4] sm:$0xf]
    %v111 = vld [vmem:[#allocation6 + $0x8] sm:$0xf]
    %v112 = vld [vmem:[#allocation6 + $0xc] sm:$0xf]
    %v113 = vld [vmem:[#allocation6 + $0x10] sm:$0xf]
    %v114 = vld [vmem:[#allocation6 + $0x14] sm:$0xf]
    %v115 = vld [vmem:[#allocation6 + $0x18] sm:$0xf]
    %v116 = vld [vmem:[#allocation6 + $0x1c] sm:$0xf]
    %v117 = vld [vmem:[#allocation6 + $0x20] sm:$0xf]
    %v118 = vld [vmem:[#allocation6 + $0x24] sm:$0xf]
    %v119 = vld [vmem:[#allocation6 + $0x28] sm:$0xf]
    %v120 = vld [vmem:[#allocation6 + $0x2c] sm:$0xf]
    %v121 = vld [vmem:[#allocation6 + $0x30] sm:$0xf]
    %v122 = vld [vmem:[#allocation6 + $0x34] sm:$0xf]
    %v123 = vld [vmem:[#allocation6 + $0x38] sm:$0xf]
    %v124 = vld [vmem:[#allocation6 + $0x3c] sm:$0xf]
    %v125 = vld [vmem:[%s4] sm:$0x1]
    %v127 = vlaneseq
    %v128 = vshrl.u32 %v127, 7
    %v129 = vsub.s32 0, %v128
    %v130 = vrot.slane %v125, %v129
    %v148 = vunpack.c.l.b16 %v93
    %v149 = vunpack.c.l.b16 %v94
    %v150 = vunpack.c.l.b16 %v95
    %v151 = vunpack.c.l.b16 %v96
    %v152 = vunpack.c.l.b16 %v97
    %v153 = vunpack.c.l.b16 %v98
    %v154 = vunpack.c.l.b16 %v99
    %v155 = vunpack.c.l.b16 %v100
    %v156 = vunpack.c.l.b16 %v101
    %v157 = vunpack.c.l.b16 %v102
    %v158 = vunpack.c.l.b16 %v103
    %v159 = vunpack.c.l.b16 %v104
    %v160 = vunpack.c.l.b16 %v105
    %v161 = vunpack.c.l.b16 %v106
    %v162 = vunpack.c.l.b16 %v107
    %v163 = vunpack.c.l.b16 %v108
    %v164 = vpack.c.b16 %v149, %v148
    %v165 = vpack.c.b16 %v151, %v150
    %v166 = vpack.c.b16 %v153, %v152
    %v167 = vpack.c.b16 %v155, %v154
    %v168 = vpack.c.b16 %v157, %v156
    %v169 = vpack.c.b16 %v159, %v158
    %v170 = vpack.c.b16 %v161, %v160
    %v171 = vpack.c.b16 %v163, %v162
    %v196 = vunpack.c.l.b16 %v109
    %v197 = vunpack.c.l.b16 %v110
    %v198 = vunpack.c.l.b16 %v111
    %v199 = vunpack.c.l.b16 %v112
    %v200 = vunpack.c.l.b16 %v113
    %v201 = vunpack.c.l.b16 %v114
    %v202 = vunpack.c.l.b16 %v115
    %v203 = vunpack.c.l.b16 %v116
    %v204 = vunpack.c.l.b16 %v117
    %v205 = vunpack.c.l.b16 %v118
    %v206 = vunpack.c.l.b16 %v119
    %v207 = vunpack.c.l.b16 %v120
    %v208 = vunpack.c.l.b16 %v121
    %v209 = vunpack.c.l.b16 %v122
    %v210 = vunpack.c.l.b16 %v123
    %v211 = vunpack.c.l.b16 %v124
    %v212 = vpack.c.b16 %v197, %v196
    %v213 = vpack.c.b16 %v199, %v198
    %v214 = vpack.c.b16 %v201, %v200
    %v215 = vpack.c.b16 %v203, %v202
    %v216 = vpack.c.b16 %v205, %v204
    %v217 = vpack.c.b16 %v207, %v206
    %v218 = vpack.c.b16 %v209, %v208
    %v219 = vpack.c.b16 %v211, %v210
    %228 = vmatprep.subr.bf16.mxu0 0
    %229 = vmatpush1.bf16.msra.mxu0 %v212
    %230 = vmatprep.subr.bf16.mxu0 0
    %231 = vmatpush1.bf16.msra.mxu0 %v213
    %232 = vmatprep.subr.bf16.mxu0 0
    %233 = vmatpush1.bf16.msra.mxu0 %v214
    %234 = vmatprep.subr.bf16.mxu0 0
    %235 = vmatpush1.bf16.msra.mxu0 %v215
    %236 = vmatprep.subr.bf16.mxu0 0
    %237 = vmatpush1.bf16.msra.mxu0 %v216
    %238 = vmatprep.subr.bf16.mxu0 0
    %239 = vmatpush1.bf16.msra.mxu0 %v217
    %240 = vmatprep.subr.bf16.mxu0 0
    %241 = vmatpush1.bf16.msra.mxu0 %v218
    %242 = vmatprep.subr.bf16.mxu0 0
    %243 = vmatpush1.bf16.msra.mxu0 %v219
    %244 = vmatprep.subr.bf16.mxu0 0
    %245 = vmatpush1.bf16.msra.mxu0 0
    %246 = vmatprep.subr.bf16.mxu0 0
    %247 = vmatpush1.bf16.msra.mxu0 0
    %248 = vmatprep.subr.bf16.mxu0 0
    %249 = vmatpush1.bf16.msra.mxu0 0
    %250 = vmatprep.subr.bf16.mxu0 0
    %251 = vmatpush1.bf16.msra.mxu0 0
    %252 = vmatprep.subr.bf16.mxu0 0
    %253 = vmatpush1.bf16.msra.mxu0 0
    %254 = vmatprep.subr.bf16.mxu0 0
    %255 = vmatpush1.bf16.msra.mxu0 0
    %256 = vmatprep.subr.bf16.mxu0 0
    %257 = vmatpush1.bf16.msra.mxu0 0
    %258 = vmatprep.subr.bf16.mxu0 0
    %259 = vmatpush1.bf16.msra.mxu0 0
    %260 = vmatprep.mubr.bf16.mxu0 0
    %261 = vmatmul.mubr.bf16.gmra.mrb[0].mxu0 %v164
    %v262 = vpop.f32.mrb[0].mxu0
    %v263 = vadd.f32 %v130, %v262
    %v264 = vpop.f32.mrb[0].mxu0
    %v265 = vpop.f32.mrb[0].mxu0
    %v266 = vadd.f32 %v130, %v265
    %v267 = vpop.f32.mrb[0].mxu0
    %268 = vmatprep.mubr.bf16.mxu0 0
    %269 = vmatmul.mubr.bf16.gmra.mrb[0].mxu0 %v165
    %v270 = vpop.f32.mrb[0].mxu0
    %v271 = vadd.f32 %v130, %v270
    %v272 = vpop.f32.mrb[0].mxu0
    %v273 = vpop.f32.mrb[0].mxu0
    %v274 = vadd.f32 %v130, %v273
    %v275 = vpop.f32.mrb[0].mxu0
    %276 = vmatprep.mubr.bf16.mxu0 0
    %277 = vmatmul.mubr.bf16.gmra.mrb[0].mxu0 %v166
    %v278 = vpop.f32.mrb[0].mxu0
    %v279 = vadd.f32 %v130, %v278
    %v280 = vpop.f32.mrb[0].mxu0
    %v281 = vpop.f32.mrb[0].mxu0
    %v282 = vadd.f32 %v130, %v281
    %v283 = vpop.f32.mrb[0].mxu0
    %284 = vmatprep.mubr.bf16.mxu0 0
    %285 = vmatmul.mubr.bf16.gmra.mrb[0].mxu0 %v167
    %v286 = vpop.f32.mrb[0].mxu0
    %v287 = vadd.f32 %v130, %v286
    %v288 = vpop.f32.mrb[0].mxu0
    %v289 = vpop.f32.mrb[0].mxu0
    %v290 = vadd.f32 %v130, %v289
    %v291 = vpop.f32.mrb[0].mxu0
    %292 = vmatprep.mubr.bf16.mxu0 0
    %293 = vmatmul.mubr.bf16.gmra.mrb[0].mxu0 %v168
    %v294 = vpop.f32.mrb[0].mxu0
    %v295 = vadd.f32 %v130, %v294
    %v296 = vpop.f32.mrb[0].mxu0
    %v297 = vpop.f32.mrb[0].mxu0
    %v298 = vadd.f32 %v130, %v297
    %v299 = vpop.f32.mrb[0].mxu0
    %300 = vmatprep.mubr.bf16.mxu0 0
    %301 = vmatmul.mubr.bf16.gmra.mrb[0].mxu0 %v169
    %v302 = vpop.f32.mrb[0].mxu0
    %v303 = vadd.f32 %v130, %v302
    %v304 = vpop.f32.mrb[0].mxu0
    %v305 = vpop.f32.mrb[0].mxu0
    %v306 = vadd.f32 %v130, %v305
    %v307 = vpop.f32.mrb[0].mxu0
    %308 = vmatprep.mubr.bf16.mxu0 0
    %309 = vmatmul.mubr.bf16.gmra.mrb[0].mxu0 %v170
    %v310 = vpop.f32.mrb[0].mxu0
    %v311 = vadd.f32 %v130, %v310
    %v312 = vpop.f32.mrb[0].mxu0
    %v313 = vpop.f32.mrb[0].mxu0
    %v314 = vadd.f32 %v130, %v313
    %v315 = vpop.f32.mrb[0].mxu0
    %316 = vmatprep.mubr.bf16.mxu0 0
    %317 = vmatmul.mubr.bf16.gmra.mrb[0].mxu0 %v171
    %v318 = vpop.f32.mrb[0].mxu0
    %v319 = vadd.f32 %v130, %v318
    %v320 = vpop.f32.mrb[0].mxu0
    %v321 = vpop.f32.mrb[0].mxu0
    %v322 = vadd.f32 %v130, %v321
    %v323 = vpop.f32.mrb[0].mxu0
    %324 = vdwg.mxu0
    %v325 = vmax.f32 %v263, 0.0
    %v326 = vmax.f32 %v266, 0.0
    %v327 = vmax.f32 %v271, 0.0
    %v328 = vmax.f32 %v274, 0.0
    %v329 = vmax.f32 %v279, 0.0
    %v330 = vmax.f32 %v282, 0.0
    %v331 = vmax.f32 %v287, 0.0
    %v332 = vmax.f32 %v290, 0.0
    %v333 = vmax.f32 %v295, 0.0
    %v334 = vmax.f32 %v298, 0.0
    %v335 = vmax.f32 %v303, 0.0
    %v336 = vmax.f32 %v306, 0.0
    %v337 = vmax.f32 %v311, 0.0
    %v338 = vmax.f32 %v314, 0.0
    %v339 = vmax.f32 %v319, 0.0
    %v340 = vmax.f32 %v322, 0.0
    %v341 = vpack.c.bf16 %v326, %v325
    %v342 = vpack.c.bf16 %v328, %v327
    %v343 = vpack.c.bf16 %v330, %v329
    %v344 = vpack.c.bf16 %v332, %v331
    %v345 = vpack.c.bf16 %v334, %v333
    %v346 = vpack.c.bf16 %v336, %v335
    %v347 = vpack.c.bf16 %v338, %v337
    %v348 = vpack.c.bf16 %v340, %v339
    %v349 = vld [vmem:[#allocation8] sm:$0xf]
    %v350 = vld [vmem:[#allocation8 + $0x4] sm:$0xf]
    %v351 = vld [vmem:[#allocation8 + $0x8] sm:$0xf]
    %v352 = vld [vmem:[#allocation8 + $0xc] sm:$0xf]
    %v353 = vld [vmem:[#allocation8 + $0x10] sm:$0xf]
    %v354 = vld [vmem:[#allocation8 + $0x14] sm:$0xf]
    %v355 = vld [vmem:[#allocation8 + $0x18] sm:$0xf]
    %v356 = vld [vmem:[#allocation8 + $0x1c] sm:$0xf]
    %v357 = vld [vmem:[#allocation8 + $0x20] sm:$0xf]
    %v358 = vld [vmem:[#allocation8 + $0x24] sm:$0xf]
    %v359 = vld [vmem:[#allocation8 + $0x28] sm:$0xf]
    %v360 = vld [vmem:[#allocation8 + $0x2c] sm:$0xf]
    %v361 = vld [vmem:[#allocation8 + $0x30] sm:$0xf]
    %v362 = vld [vmem:[#allocation8 + $0x34] sm:$0xf]
    %v363 = vld [vmem:[#allocation8 + $0x38] sm:$0xf]
    %v364 = vld [vmem:[#allocation8 + $0x3c] sm:$0xf]
    %v381 = vunpack.c.l.b16 %v349
    %v382 = vunpack.c.l.b16 %v350
    %v383 = vunpack.c.l.b16 %v351
    %v384 = vunpack.c.l.b16 %v352
    %v385 = vunpack.c.l.b16 %v353
    %v386 = vunpack.c.l.b16 %v354
    %v387 = vunpack.c.l.b16 %v355
    %v388 = vunpack.c.l.b16 %v356
    %v389 = vunpack.c.l.b16 %v357
    %v390 = vunpack.c.l.b16 %v358
    %v391 = vunpack.c.l.b16 %v359
    %v392 = vunpack.c.l.b16 %v360
    %v393 = vunpack.c.l.b16 %v361
    %v394 = vunpack.c.l.b16 %v362
    %v395 = vunpack.c.l.b16 %v363
    %v396 = vunpack.c.l.b16 %v364
    %v397 = vpack.c.b16 %v382, %v381
    %v398 = vpack.c.b16 %v384, %v383
    %v399 = vpack.c.b16 %v386, %v385
    %v400 = vpack.c.b16 %v388, %v387
    %v401 = vpack.c.b16 %v390, %v389
    %v402 = vpack.c.b16 %v392, %v391
    %v403 = vpack.c.b16 %v394, %v393
    %v404 = vpack.c.b16 %v396, %v395
    %413 = vmatprep.subr.bf16.mxu0 0
    %414 = vmatpush1.bf16.msra.mxu0 %v397
    %415 = vmatprep.subr.bf16.mxu0 0
    %416 = vmatpush1.bf16.msra.mxu0 %v398
    %417 = vmatprep.subr.bf16.mxu0 0
    %418 = vmatpush1.bf16.msra.mxu0 %v399
    %419 = vmatprep.subr.bf16.mxu0 0
    %420 = vmatpush1.bf16.msra.mxu0 %v400
    %421 = vmatprep.subr.bf16.mxu0 0
    %422 = vmatpush1.bf16.msra.mxu0 %v401
    %423 = vmatprep.subr.bf16.mxu0 0
    %424 = vmatpush1.bf16.msra.mxu0 %v402
    %425 = vmatprep.subr.bf16.mxu0 0
    %426 = vmatpush1.bf16.msra.mxu0 %v403
    %427 = vmatprep.subr.bf16.mxu0 0
    %428 = vmatpush1.bf16.msra.mxu0 %v404
    %429 = vmatprep.subr.bf16.mxu0 0
    %430 = vmatpush1.bf16.msra.mxu0 0
    %431 = vmatprep.subr.bf16.mxu0 0
    %432 = vmatpush1.bf16.msra.mxu0 0
    %433 = vmatprep.subr.bf16.mxu0 0
    %434 = vmatpush1.bf16.msra.mxu0 0
    %435 = vmatprep.subr.bf16.mxu0 0
    %436 = vmatpush1.bf16.msra.mxu0 0
    %437 = vmatprep.subr.bf16.mxu0 0
    %438 = vmatpush1.bf16.msra.mxu0 0
    %439 = vmatprep.subr.bf16.mxu0 0
    %440 = vmatpush1.bf16.msra.mxu0 0
    %441 = vmatprep.subr.bf16.mxu0 0
    %442 = vmatpush1.bf16.msra.mxu0 0
    %443 = vmatprep.subr.bf16.mxu0 0
    %444 = vmatpush1.bf16.msra.mxu0 0
    %445 = vmatprep.mubr.bf16.mxu0 0
    %446 = vmatmul.mubr.bf16.gmra.mrb[0].mxu0 %v341
    %v447 = vpop.f32.mrb[0].mxu0
    %v448 = vadd.f32 0.0, %v447
    %v449 = vpop.f32.mrb[0].mxu0
    %v450 = vpop.f32.mrb[0].mxu0
    %v451 = vadd.f32 0.0, %v450
    %v452 = vpop.f32.mrb[0].mxu0
    %453 = vmatprep.mubr.bf16.mxu0 0
    %454 = vmatmul.mubr.bf16.gmra.mrb[0].mxu0 %v342
    %v455 = vpop.f32.mrb[0].mxu0
    %v456 = vadd.f32 0.0, %v455
    %v457 = vpop.f32.mrb[0].mxu0
    %v458 = vpop.f32.mrb[0].mxu0
    %v459 = vadd.f32 0.0, %v458
    %v460 = vpop.f32.mrb[0].mxu0
    %461 = vmatprep.mubr.bf16.mxu0 0
    %462 = vmatmul.mubr.bf16.gmra.mrb[0].mxu0 %v343
    %v463 = vpop.f32.mrb[0].mxu0
    %v464 = vadd.f32 0.0, %v463
    %v465 = vpop.f32.mrb[0].mxu0
    %v466 = vpop.f32.mrb[0].mxu0
    %v467 = vadd.f32 0.0, %v466
    %v468 = vpop.f32.mrb[0].mxu0
    %469 = vmatprep.mubr.bf16.mxu0 0
    %470 = vmatmul.mubr.bf16.gmra.mrb[0].mxu0 %v344
    %v471 = vpop.f32.mrb[0].mxu0
    %v472 = vadd.f32 0.0, %v471
    %v473 = vpop.f32.mrb[0].mxu0
    %v474 = vpop.f32.mrb[0].mxu0
    %v475 = vadd.f32 0.0, %v474
    %v476 = vpop.f32.mrb[0].mxu0
    %477 = vmatprep.mubr.bf16.mxu0 0
    %478 = vmatmul.mubr.bf16.gmra.mrb[0].mxu0 %v345
    %v479 = vpop.f32.mrb[0].mxu0
    %v480 = vadd.f32 0.0, %v479
    %v481 = vpop.f32.mrb[0].mxu0
    %v482 = vpop.f32.mrb[0].mxu0
    %v483 = vadd.f32 0.0, %v482
    %v484 = vpop.f32.mrb[0].mxu0
    %485 = vmatprep.mubr.bf16.mxu0 0
    %486 = vmatmul.mubr.bf16.gmra.mrb[0].mxu0 %v346
    %v487 = vpop.f32.mrb[0].mxu0
    %v488 = vadd.f32 0.0, %v487
    %v489 = vpop.f32.mrb[0].mxu0
    %v490 = vpop.f32.mrb[0].mxu0
    %v491 = vadd.f32 0.0, %v490
    %v492 = vpop.f32.mrb[0].mxu0
    %493 = vmatprep.mubr.bf16.mxu0 0
    %494 = vmatmul.mubr.bf16.gmra.mrb[0].mxu0 %v347
    %v495 = vpop.f32.mrb[0].mxu0
    %v496 = vadd.f32 0.0, %v495
    %v497 = vpop.f32.mrb[0].mxu0
    %v498 = vpop.f32.mrb[0].mxu0
    %v499 = vadd.f32 0.0, %v498
    %v500 = vpop.f32.mrb[0].mxu0
    %501 = vmatprep.mubr.bf16.mxu0 0
    %502 = vmatmul.mubr.bf16.gmra.mrb[0].mxu0 %v348
    %v503 = vpop.f32.mrb[0].mxu0
    %v504 = vadd.f32 0.0, %v503
    %v505 = vpop.f32.mrb[0].mxu0
    %v506 = vpop.f32.mrb[0].mxu0
    %v507 = vadd.f32 0.0, %v506
    %v508 = vpop.f32.mrb[0].mxu0
    %509 = vdwg.mxu0
    %v510 = vpack.c.bf16 %v451, %v448
    %v511 = vpack.c.bf16 %v459, %v456
    %v512 = vpack.c.bf16 %v467, %v464
    %v513 = vpack.c.bf16 %v475, %v472
    %v514 = vpack.c.bf16 %v483, %v480
    %v515 = vpack.c.bf16 %v491, %v488
    %v516 = vpack.c.bf16 %v499, %v496
    %v517 = vpack.c.bf16 %v507, %v504
    %v518 = vld [vmem:[%s5] sm:$0x1]
    %v520 = vlaneseq
    %v521 = vshrl.u32 %v520, 7
    %v522 = vsub.s32 0, %v521
    %v523 = vrot.slane %v518, %v522
    %525 = vmatprep.subr.bf16.mxu0 0
    %526 = vmatpush1.bf16.msra.mxu0 %v510
    %527 = vmatprep.subr.bf16.mxu0 0
    %528 = vmatpush1.bf16.msra.mxu0 %v511
    %529 = vmatprep.subr.bf16.mxu0 0
    %530 = vmatpush1.bf16.msra.mxu0 %v512
    %531 = vmatprep.subr.bf16.mxu0 0
    %532 = vmatpush1.bf16.msra.mxu0 %v513
    %533 = vmatprep.subr.bf16.mxu0 0
    %534 = vmatpush1.bf16.msra.mxu0 %v514
    %535 = vmatprep.subr.bf16.mxu0 0
    %536 = vmatpush1.bf16.msra.mxu0 %v515
    %537 = vmatprep.subr.bf16.mxu0 0
    %538 = vmatpush1.bf16.msra.mxu0 %v516
    %539 = vmatprep.subr.bf16.mxu0 0
    %540 = vmatpush1.bf16.msra.mxu0 %v517
    %541 = vmatprep.subr.bf16.mxu0 0
    %542 = vmatpush1.bf16.msra.mxu0 0
    %543 = vmatprep.subr.bf16.mxu0 0
    %544 = vmatpush1.bf16.msra.mxu0 0
    %545 = vmatprep.subr.bf16.mxu0 0
    %546 = vmatpush1.bf16.msra.mxu0 0
    %547 = vmatprep.subr.bf16.mxu0 0
    %548 = vmatpush1.bf16.msra.mxu0 0
    %549 = vmatprep.subr.bf16.mxu0 0
    %550 = vmatpush1.bf16.msra.mxu0 0
    %551 = vmatprep.subr.bf16.mxu0 0
    %552 = vmatpush1.bf16.msra.mxu0 0
    %553 = vmatprep.subr.bf16.mxu0 0
    %554 = vmatpush1.bf16.msra.mxu0 0
    %555 = vmatprep.subr.bf16.mxu0 0
    %556 = vmatpush1.bf16.msra.mxu0 0
    %557 = vmatprep.mubr.bf16.mxu0 0
    %558 = vmatmul.mubr.bf16.gmra.mrb[0].mxu0 %v164
    %v559 = vpop.f32.mrb[0].mxu0
    %v560 = vadd.f32 %v523, %v559
    %v561 = vpop.f32.mrb[0].mxu0
    %v562 = vpop.f32.mrb[0].mxu0
    %v563 = vadd.f32 %v523, %v562
    %v564 = vpop.f32.mrb[0].mxu0
    %565 = vmatprep.mubr.bf16.mxu0 0
    %566 = vmatmul.mubr.bf16.gmra.mrb[0].mxu0 %v165
    %v567 = vpop.f32.mrb[0].mxu0
    %v568 = vadd.f32 %v523, %v567
    %v569 = vpop.f32.mrb[0].mxu0
    %v570 = vpop.f32.mrb[0].mxu0
    %v571 = vadd.f32 %v523, %v570
    %v572 = vpop.f32.mrb[0].mxu0
    %573 = vmatprep.mubr.bf16.mxu0 0
    %574 = vmatmul.mubr.bf16.gmra.mrb[0].mxu0 %v166
    %v575 = vpop.f32.mrb[0].mxu0
    %v576 = vadd.f32 %v523, %v575
    %v577 = vpop.f32.mrb[0].mxu0
    %v578 = vpop.f32.mrb[0].mxu0
    %v579 = vadd.f32 %v523, %v578
    %v580 = vpop.f32.mrb[0].mxu0
    %581 = vmatprep.mubr.bf16.mxu0 0
    %582 = vmatmul.mubr.bf16.gmra.mrb[0].mxu0 %v167
    %v583 = vpop.f32.mrb[0].mxu0
    %v584 = vadd.f32 %v523, %v583
    %v585 = vpop.f32.mrb[0].mxu0
    %v586 = vpop.f32.mrb[0].mxu0
    %v587 = vadd.f32 %v523, %v586
    %v588 = vpop.f32.mrb[0].mxu0
    %589 = vmatprep.mubr.bf16.mxu0 0
    %590 = vmatmul.mubr.bf16.gmra.mrb[0].mxu0 %v168
    %v591 = vpop.f32.mrb[0].mxu0
    %v592 = vadd.f32 %v523, %v591
    %v593 = vpop.f32.mrb[0].mxu0
    %v594 = vpop.f32.mrb[0].mxu0
    %v595 = vadd.f32 %v523, %v594
    %v596 = vpop.f32.mrb[0].mxu0
    %597 = vmatprep.mubr.bf16.mxu0 0
    %598 = vmatmul.mubr.bf16.gmra.mrb[0].mxu0 %v169
    %v599 = vpop.f32.mrb[0].mxu0
    %v600 = vadd.f32 %v523, %v599
    %v601 = vpop.f32.mrb[0].mxu0
    %v602 = vpop.f32.mrb[0].mxu0
    %v603 = vadd.f32 %v523, %v602
    %v604 = vpop.f32.mrb[0].mxu0
    %605 = vmatprep.mubr.bf16.mxu0 0
    %606 = vmatmul.mubr.bf16.gmra.mrb[0].mxu0 %v170
    %v607 = vpop.f32.mrb[0].mxu0
    %v608 = vadd.f32 %v523, %v607
    %v609 = vpop.f32.mrb[0].mxu0
    %v610 = vpop.f32.mrb[0].mxu0
    %v611 = vadd.f32 %v523, %v610
    %v612 = vpop.f32.mrb[0].mxu0
    %613 = vmatprep.mubr.bf16.mxu0 0
    %614 = vmatmul.mubr.bf16.gmra.mrb[0].mxu0 %v171
    %v615 = vpop.f32.mrb[0].mxu0
    %v616 = vadd.f32 %v523, %v615
    %v617 = vpop.f32.mrb[0].mxu0
    %v618 = vpop.f32.mrb[0].mxu0
    %v619 = vadd.f32 %v523, %v618
    %v620 = vpop.f32.mrb[0].mxu0
    %621 = vdwg.mxu0
    %v622 = vmax.f32 %v560, 0.0
    %v623 = vmax.f32 %v563, 0.0
    %v624 = vmax.f32 %v568, 0.0
    %v625 = vmax.f32 %v571, 0.0
    %v626 = vmax.f32 %v576, 0.0
    %v627 = vmax.f32 %v579, 0.0
    %v628 = vmax.f32 %v584, 0.0
    %v629 = vmax.f32 %v587, 0.0
    %v630 = vmax.f32 %v592, 0.0
    %v631 = vmax.f32 %v595, 0.0
    %v632 = vmax.f32 %v600, 0.0
    %v633 = vmax.f32 %v603, 0.0
    %v634 = vmax.f32 %v608, 0.0
    %v635 = vmax.f32 %v611, 0.0
    %v636 = vmax.f32 %v616, 0.0
    %v637 = vmax.f32 %v619, 0.0
    %v638 = vpack.c.bf16 %v623, %v622
    %v639 = vpack.c.bf16 %v625, %v624
    %v640 = vpack.c.bf16 %v627, %v626
    %v641 = vpack.c.bf16 %v629, %v628
    %v642 = vpack.c.bf16 %v631, %v630
    %v643 = vpack.c.bf16 %v633, %v632
    %v644 = vpack.c.bf16 %v635, %v634
    %v645 = vpack.c.bf16 %v637, %v636
    %v646 = vld [vmem:[#allocation9] sm:$0xf]
    %v647 = vld [vmem:[#allocation9 + $0x4] sm:$0xf]
    %v648 = vld [vmem:[#allocation9 + $0x8] sm:$0xf]
    %v649 = vld [vmem:[#allocation9 + $0xc] sm:$0xf]
    %v650 = vld [vmem:[#allocation9 + $0x10] sm:$0xf]
    %v651 = vld [vmem:[#allocation9 + $0x14] sm:$0xf]
    %v652 = vld [vmem:[#allocation9 + $0x18] sm:$0xf]
    %v653 = vld [vmem:[#allocation9 + $0x1c] sm:$0xf]
    %v654 = vld [vmem:[#allocation9 + $0x20] sm:$0xf]
    %v655 = vld [vmem:[#allocation9 + $0x24] sm:$0xf]
    %v656 = vld [vmem:[#allocation9 + $0x28] sm:$0xf]
    %v657 = vld [vmem:[#allocation9 + $0x2c] sm:$0xf]
    %v658 = vld [vmem:[#allocation9 + $0x30] sm:$0xf]
    %v659 = vld [vmem:[#allocation9 + $0x34] sm:$0xf]
    %v660 = vld [vmem:[#allocation9 + $0x38] sm:$0xf]
    %v661 = vld [vmem:[#allocation9 + $0x3c] sm:$0xf]
    %v678 = vunpack.c.l.b16 %v646
    %v679 = vunpack.c.l.b16 %v647
    %v680 = vunpack.c.l.b16 %v648
    %v681 = vunpack.c.l.b16 %v649
    %v682 = vunpack.c.l.b16 %v650
    %v683 = vunpack.c.l.b16 %v651
    %v684 = vunpack.c.l.b16 %v652
    %v685 = vunpack.c.l.b16 %v653
    %v686 = vunpack.c.l.b16 %v654
    %v687 = vunpack.c.l.b16 %v655
    %v688 = vunpack.c.l.b16 %v656
    %v689 = vunpack.c.l.b16 %v657
    %v690 = vunpack.c.l.b16 %v658
    %v691 = vunpack.c.l.b16 %v659
    %v692 = vunpack.c.l.b16 %v660
    %v693 = vunpack.c.l.b16 %v661
    %v694 = vpack.c.b16 %v679, %v678
    %v695 = vpack.c.b16 %v681, %v680
    %v696 = vpack.c.b16 %v683, %v682
    %v697 = vpack.c.b16 %v685, %v684
    %v698 = vpack.c.b16 %v687, %v686
    %v699 = vpack.c.b16 %v689, %v688
    %v700 = vpack.c.b16 %v691, %v690
    %v701 = vpack.c.b16 %v693, %v692
    %710 = vmatprep.subr.bf16.mxu0 0
    %711 = vmatpush1.bf16.msra.mxu0 %v694
    %712 = vmatprep.subr.bf16.mxu0 0
    %713 = vmatpush1.bf16.msra.mxu0 %v695
    %714 = vmatprep.subr.bf16.mxu0 0
    %715 = vmatpush1.bf16.msra.mxu0 %v696
    %716 = vmatprep.subr.bf16.mxu0 0
    %717 = vmatpush1.bf16.msra.mxu0 %v697
    %718 = vmatprep.subr.bf16.mxu0 0
    %719 = vmatpush1.bf16.msra.mxu0 %v698
    %720 = vmatprep.subr.bf16.mxu0 0
    %721 = vmatpush1.bf16.msra.mxu0 %v699
    %722 = vmatprep.subr.bf16.mxu0 0
    %723 = vmatpush1.bf16.msra.mxu0 %v700
    %724 = vmatprep.subr.bf16.mxu0 0
    %725 = vmatpush1.bf16.msra.mxu0 %v701
    %726 = vmatprep.subr.bf16.mxu0 0
    %727 = vmatpush1.bf16.msra.mxu0 0
    %728 = vmatprep.subr.bf16.mxu0 0
    %729 = vmatpush1.bf16.msra.mxu0 0
    %730 = vmatprep.subr.bf16.mxu0 0
    %731 = vmatpush1.bf16.msra.mxu0 0
    %732 = vmatprep.subr.bf16.mxu0 0
    %733 = vmatpush1.bf16.msra.mxu0 0
    %734 = vmatprep.subr.bf16.mxu0 0
    %735 = vmatpush1.bf16.msra.mxu0 0
    %736 = vmatprep.subr.bf16.mxu0 0
    %737 = vmatpush1.bf16.msra.mxu0 0
    %738 = vmatprep.subr.bf16.mxu0 0
    %739 = vmatpush1.bf16.msra.mxu0 0
    %740 = vmatprep.subr.bf16.mxu0 0
    %741 = vmatpush1.bf16.msra.mxu0 0
    %742 = vmatprep.mubr.bf16.mxu0 0
    %743 = vmatmul.mubr.bf16.gmra.mrb[0].mxu0 %v638
    %v744 = vpop.f32.mrb[0].mxu0
    %v745 = vadd.f32 0.0, %v744
    %v746 = vpop.f32.mrb[0].mxu0
    %v747 = vpop.f32.mrb[0].mxu0
    %v748 = vadd.f32 0.0, %v747
    %v749 = vpop.f32.mrb[0].mxu0
    %750 = vmatprep.mubr.bf16.mxu0 0
    %751 = vmatmul.mubr.bf16.gmra.mrb[0].mxu0 %v639
    %v752 = vpop.f32.mrb[0].mxu0
    %v753 = vadd.f32 0.0, %v752
    %v754 = vpop.f32.mrb[0].mxu0
    %v755 = vpop.f32.mrb[0].mxu0
    %v756 = vadd.f32 0.0, %v755
    %v757 = vpop.f32.mrb[0].mxu0
    %758 = vmatprep.mubr.bf16.mxu0 0
    %759 = vmatmul.mubr.bf16.gmra.mrb[0].mxu0 %v640
    %v760 = vpop.f32.mrb[0].mxu0
    %v761 = vadd.f32 0.0, %v760
    %v762 = vpop.f32.mrb[0].mxu0
    %v763 = vpop.f32.mrb[0].mxu0
    %v764 = vadd.f32 0.0, %v763
    %v765 = vpop.f32.mrb[0].mxu0
    %766 = vmatprep.mubr.bf16.mxu0 0
    %767 = vmatmul.mubr.bf16.gmra.mrb[0].mxu0 %v641
    %v768 = vpop.f32.mrb[0].mxu0
    %v769 = vadd.f32 0.0, %v768
    %v770 = vpop.f32.mrb[0].mxu0
    %v771 = vpop.f32.mrb[0].mxu0
    %v772 = vadd.f32 0.0, %v771
    %v773 = vpop.f32.mrb[0].mxu0
    %774 = vmatprep.mubr.bf16.mxu0 0
    %775 = vmatmul.mubr.bf16.gmra.mrb[0].mxu0 %v642
    %v776 = vpop.f32.mrb[0].mxu0
    %v777 = vadd.f32 0.0, %v776
    %v778 = vpop.f32.mrb[0].mxu0
    %v779 = vpop.f32.mrb[0].mxu0
    %v780 = vadd.f32 0.0, %v779
    %v781 = vpop.f32.mrb[0].mxu0
    %782 = vmatprep.mubr.bf16.mxu0 0
    %783 = vmatmul.mubr.bf16.gmra.mrb[0].mxu0 %v643
    %v784 = vpop.f32.mrb[0].mxu0
    %v785 = vadd.f32 0.0, %v784
    %v786 = vpop.f32.mrb[0].mxu0
    %v787 = vpop.f32.mrb[0].mxu0
    %v788 = vadd.f32 0.0, %v787
    %v789 = vpop.f32.mrb[0].mxu0
    %790 = vmatprep.mubr.bf16.mxu0 0
    %791 = vmatmul.mubr.bf16.gmra.mrb[0].mxu0 %v644
    %v792 = vpop.f32.mrb[0].mxu0
    %v793 = vadd.f32 0.0, %v792
    %v794 = vpop.f32.mrb[0].mxu0
    %v795 = vpop.f32.mrb[0].mxu0
    %v796 = vadd.f32 0.0, %v795
    %v797 = vpop.f32.mrb[0].mxu0
    %798 = vmatprep.mubr.bf16.mxu0 0
    %799 = vmatmul.mubr.bf16.gmra.mrb[0].mxu0 %v645
    %v800 = vpop.f32.mrb[0].mxu0
    %v801 = vadd.f32 0.0, %v800
    %v802 = vpop.f32.mrb[0].mxu0
    %v803 = vpop.f32.mrb[0].mxu0
    %v804 = vadd.f32 0.0, %v803
    %v805 = vpop.f32.mrb[0].mxu0
    %806 = vdwg.mxu0
    %v807 = vpack.c.bf16 %v748, %v745
    %v808 = vpack.c.bf16 %v756, %v753
    %v809 = vpack.c.bf16 %v764, %v761
    %v810 = vpack.c.bf16 %v772, %v769
    %v811 = vpack.c.bf16 %v780, %v777
    %v812 = vpack.c.bf16 %v788, %v785
    %v813 = vpack.c.bf16 %v796, %v793
    %v814 = vpack.c.bf16 %v804, %v801
    %v815 = vld [vmem:[%s6] sm:$0x1]
    %v817 = vlaneseq
    %v818 = vshrl.u32 %v817, 7
    %v819 = vsub.s32 0, %v818
    %v820 = vrot.slane %v815, %v819
    %822 = vmatprep.subr.bf16.mxu0 0
    %823 = vmatpush1.bf16.msra.mxu0 %v807
    %824 = vmatprep.subr.bf16.mxu0 0
    %825 = vmatpush1.bf16.msra.mxu0 %v808
    %826 = vmatprep.subr.bf16.mxu0 0
    %827 = vmatpush1.bf16.msra.mxu0 %v809
    %828 = vmatprep.subr.bf16.mxu0 0
    %829 = vmatpush1.bf16.msra.mxu0 %v810
    %830 = vmatprep.subr.bf16.mxu0 0
    %831 = vmatpush1.bf16.msra.mxu0 %v811
    %832 = vmatprep.subr.bf16.mxu0 0
    %833 = vmatpush1.bf16.msra.mxu0 %v812
    %834 = vmatprep.subr.bf16.mxu0 0
    %835 = vmatpush1.bf16.msra.mxu0 %v813
    %836 = vmatprep.subr.bf16.mxu0 0
    %837 = vmatpush1.bf16.msra.mxu0 %v814
    %838 = vmatprep.subr.bf16.mxu0 0
    %839 = vmatpush1.bf16.msra.mxu0 0
    %840 = vmatprep.subr.bf16.mxu0 0
    %841 = vmatpush1.bf16.msra.mxu0 0
    %842 = vmatprep.subr.bf16.mxu0 0
    %843 = vmatpush1.bf16.msra.mxu0 0
    %844 = vmatprep.subr.bf16.mxu0 0
    %845 = vmatpush1.bf16.msra.mxu0 0
    %846 = vmatprep.subr.bf16.mxu0 0
    %847 = vmatpush1.bf16.msra.mxu0 0
    %848 = vmatprep.subr.bf16.mxu0 0
    %849 = vmatpush1.bf16.msra.mxu0 0
    %850 = vmatprep.subr.bf16.mxu0 0
    %851 = vmatpush1.bf16.msra.mxu0 0
    %852 = vmatprep.subr.bf16.mxu0 0
    %853 = vmatpush1.bf16.msra.mxu0 0
    %854 = vmatprep.mubr.bf16.mxu0 0
    %855 = vmatmul.mubr.bf16.gmra.mrb[0].mxu0 %v164
    %v856 = vpop.f32.mrb[0].mxu0
    %v857 = vadd.f32 %v820, %v856
    %v858 = vpop.f32.mrb[0].mxu0
    %v859 = vpop.f32.mrb[0].mxu0
    %v860 = vadd.f32 %v820, %v859
    %v861 = vpop.f32.mrb[0].mxu0
    %862 = vmatprep.mubr.bf16.mxu0 0
    %863 = vmatmul.mubr.bf16.gmra.mrb[0].mxu0 %v165
    %v864 = vpop.f32.mrb[0].mxu0
    %v865 = vadd.f32 %v820, %v864
    %v866 = vpop.f32.mrb[0].mxu0
    %v867 = vpop.f32.mrb[0].mxu0
    %v868 = vadd.f32 %v820, %v867
    %v869 = vpop.f32.mrb[0].mxu0
    %870 = vmatprep.mubr.bf16.mxu0 0
    %871 = vmatmul.mubr.bf16.gmra.mrb[0].mxu0 %v166
    %v872 = vpop.f32.mrb[0].mxu0
    %v873 = vadd.f32 %v820, %v872
    %v874 = vpop.f32.mrb[0].mxu0
    %v875 = vpop.f32.mrb[0].mxu0
    %v876 = vadd.f32 %v820, %v875
    %v877 = vpop.f32.mrb[0].mxu0
    %878 = vmatprep.mubr.bf16.mxu0 0
    %879 = vmatmul.mubr.bf16.gmra.mrb[0].mxu0 %v167
    %v880 = vpop.f32.mrb[0].mxu0
    %v881 = vadd.f32 %v820, %v880
    %v882 = vpop.f32.mrb[0].mxu0
    %v883 = vpop.f32.mrb[0].mxu0
    %v884 = vadd.f32 %v820, %v883
    %v885 = vpop.f32.mrb[0].mxu0
    %886 = vmatprep.mubr.bf16.mxu0 0
    %887 = vmatmul.mubr.bf16.gmra.mrb[0].mxu0 %v168
    %v888 = vpop.f32.mrb[0].mxu0
    %v889 = vadd.f32 %v820, %v888
    %v890 = vpop.f32.mrb[0].mxu0
    %v891 = vpop.f32.mrb[0].mxu0
    %v892 = vadd.f32 %v820, %v891
    %v893 = vpop.f32.mrb[0].mxu0
    %894 = vmatprep.mubr.bf16.mxu0 0
    %895 = vmatmul.mubr.bf16.gmra.mrb[0].mxu0 %v169
    %v896 = vpop.f32.mrb[0].mxu0
    %v897 = vadd.f32 %v820, %v896
    %v898 = vpop.f32.mrb[0].mxu0
    %v899 = vpop.f32.mrb[0].mxu0
    %v900 = vadd.f32 %v820, %v899
    %v901 = vpop.f32.mrb[0].mxu0
    %902 = vmatprep.mubr.bf16.mxu0 0
    %903 = vmatmul.mubr.bf16.gmra.mrb[0].mxu0 %v170
    %v904 = vpop.f32.mrb[0].mxu0
    %v905 = vadd.f32 %v820, %v904
    %v906 = vpop.f32.mrb[0].mxu0
    %v907 = vpop.f32.mrb[0].mxu0
    %v908 = vadd.f32 %v820, %v907
    %v909 = vpop.f32.mrb[0].mxu0
    %910 = vmatprep.mubr.bf16.mxu0 0
    %911 = vmatmul.mubr.bf16.gmra.mrb[0].mxu0 %v171
    %v912 = vpop.f32.mrb[0].mxu0
    %v913 = vadd.f32 %v820, %v912
    %v914 = vpop.f32.mrb[0].mxu0
    %v915 = vpop.f32.mrb[0].mxu0
    %v916 = vadd.f32 %v820, %v915
    %v917 = vpop.f32.mrb[0].mxu0
    %918 = vdwg.mxu0
    %v919 = vmax.f32 %v857, 0.0
    %v920 = vmax.f32 %v860, 0.0
    %v921 = vmax.f32 %v865, 0.0
    %v922 = vmax.f32 %v868, 0.0
    %v923 = vmax.f32 %v873, 0.0
    %v924 = vmax.f32 %v876, 0.0
    %v925 = vmax.f32 %v881, 0.0
    %v926 = vmax.f32 %v884, 0.0
    %v927 = vmax.f32 %v889, 0.0
    %v928 = vmax.f32 %v892, 0.0
    %v929 = vmax.f32 %v897, 0.0
    %v930 = vmax.f32 %v900, 0.0
    %v931 = vmax.f32 %v905, 0.0
    %v932 = vmax.f32 %v908, 0.0
    %v933 = vmax.f32 %v913, 0.0
    %v934 = vmax.f32 %v916, 0.0
    %v935 = vpack.c.bf16 %v920, %v919
    %v936 = vpack.c.bf16 %v922, %v921
    %v937 = vpack.c.bf16 %v924, %v923
    %v938 = vpack.c.bf16 %v926, %v925
    %v939 = vpack.c.bf16 %v928, %v927
    %v940 = vpack.c.bf16 %v930, %v929
    %v941 = vpack.c.bf16 %v932, %v931
    %v942 = vpack.c.bf16 %v934, %v933
    %v943 = vld [vmem:[%s7] sm:$0xf]
    %944 = vmatprep.subr.bf16.mxu0 0
    %945 = vmatpush1.bf16.msra.mxu0 %v935
    %946 = vmatprep.subr.bf16.mxu0 0
    %947 = vmatpush1.bf16.msra.mxu0 %v936
    %948 = vmatprep.subr.bf16.mxu0 0
    %949 = vmatpush1.bf16.msra.mxu0 %v937
    %950 = vmatprep.subr.bf16.mxu0 0
    %951 = vmatpush1.bf16.msra.mxu0 %v938
    %952 = vmatprep.subr.bf16.mxu0 0
    %953 = vmatpush1.bf16.msra.mxu0 %v939
    %954 = vmatprep.subr.bf16.mxu0 0
    %955 = vmatpush1.bf16.msra.mxu0 %v940
    %956 = vmatprep.subr.bf16.mxu0 0
    %957 = vmatpush1.bf16.msra.mxu0 %v941
    %958 = vmatprep.subr.bf16.mxu0 0
    %959 = vmatpush1.bf16.msra.mxu0 %v942
    %960 = vmatprep.subr.bf16.mxu0 0
    %961 = vmatpush1.bf16.msra.mxu0 0
    %962 = vmatprep.subr.bf16.mxu0 0
    %963 = vmatpush1.bf16.msra.mxu0 0
    %964 = vmatprep.subr.bf16.mxu0 0
    %965 = vmatpush1.bf16.msra.mxu0 0
    %966 = vmatprep.subr.bf16.mxu0 0
    %967 = vmatpush1.bf16.msra.mxu0 0
    %968 = vmatprep.subr.bf16.mxu0 0
    %969 = vmatpush1.bf16.msra.mxu0 0
    %970 = vmatprep.subr.bf16.mxu0 0
    %971 = vmatpush1.bf16.msra.mxu0 0
    %972 = vmatprep.subr.bf16.mxu0 0
    %973 = vmatpush1.bf16.msra.mxu0 0
    %974 = vmatprep.subr.bf16.mxu0 0
    %975 = vmatpush1.bf16.msra.mxu0 0
    %976 = vmatprep.mubr.bf16.mxu0 0
    %977 = vmatmul.mubr.bf16.gmra.mrb[0].mxu0 %v943
    %v978 = vpop.f32.mrb[0].mxu0
    %v979 = vadd.f32 0.0, %v978
    %v980 = vpop.f32.mrb[0].mxu0
    %v981 = vpop.f32.mrb[0].mxu0
    %v982 = vpop.f32.mrb[0].mxu0
    %983 = vdwg.mxu0
    %v984 = vld [vmem:[%s8] sm:$0x1]
    %v986 = vlaneseq
    %v987 = vshrl.u32 %v986, 7
    %v988 = vsub.s32 0, %v987
    %v989 = vrot.slane %v984, %v988
    %v991 = vmul.f32 %v979, %v989
    %992 = vadd.xlane.f32.xlu0 %v991
    %v993 = vpop.xlane.xlu0 %992
    %s994 = sld [smem:[#allocation2]]
    %v995 = vstv %s994
    %v996 = vadd.f32 %v993, %v995
    %997 = vst [vmem:[#allocation11] sm:$0xff] %v996
    // Predicated region
    $region58: #{tpu_custom_call.1} parent=1 // pred_check
      _
    $region59: #{tpu_custom_call.1} parent=1 // pred_check_branch
      %999 = sbr.rel (0) target = $region61
    $region60: #{tpu_custom_call.1} parent=1 // pred_region
      %s1001 = ssub.s32 128, 128
      %1002 = vsyncadd [#allocation5], %s1001
      %s1004 = sshll.u32 [#allocation11], 4
      %s1005 = int_to_ptr.vmem [resolvable:$true] %s1004
      %1007 = dma.vmem_to_hbm [thread:$0]  %s1005, 128, %s10, [#allocation5]
    $region61: #{tpu_custom_call.1} parent=1 // pred_fallthru
      _
    // Predicated region
    $region62: #{tpu_custom_call.1} parent=1 // pred_check
      _
    $region63: #{tpu_custom_call.1} parent=1 // pred_check_branch
      %1009 = sbr.rel (0) target = $region65
    $region64: #{tpu_custom_call.1} parent=1 // pred_region
      %1010 = dma.done [#allocation5], 128
    $region65: #{tpu_custom_call.1} parent=1 // pred_fallthru
      _
    %1011 = vsyncpa [#allocation4], 1
    %1012 = vsyncpa [#allocation7], 1
    %1013 = vsyncpa [#allocation10], 1
    %1014 = vsyncpa [#allocation5], 1

</llo_original>
